<compile_context>
chip_gen: v6e
topology: v6e:2x2x1
jax: 0.10.0
libtpu: 0.0.40
codegen_flags: <defaults>
</compile_context>

<pallas_src>
import functools

import jax
import jax.numpy as jnp
from jax.experimental import pallas as pl
from jax.experimental.pallas import tpu as pltpu

_LANE = 128
_MIB = 1024 * 1024


def _cdiv(a, b):
    return -(-a // b)


_VMEM_LIMIT_CACHE = None


def _vmem_limit_bytes():
    """Scoped-VMEM budget derived from the device's physical VMEM capacity."""
    global _VMEM_LIMIT_CACHE
    if _VMEM_LIMIT_CACHE is None:
        cap = None
        try:
            cap = getattr(pltpu.get_tpu_info(), "vmem_capacity_bytes", None)
        except Exception:
            cap = None
        if not cap:
            cap = 64 * _MIB  # conservative: v7x physical VMEM
        # >=16 MiB headroom on v7x (64 MiB physical); cap at 64 MiB on the
        # 128 MiB parts (v5e/v6e).
        _VMEM_LIMIT_CACHE = int(max(32 * _MIB, min(cap - 16 * _MIB, 64 * _MIB)))
    return _VMEM_LIMIT_CACHE


def _pick_tile_rows(d_eff, rows_f, itemsize, vmem_limit, io_bufs, f32_temps,
                    max_rows=None):
    """Row-tile size from the VMEM budget.

    io_bufs counts double-buffered in/out tiles (input dtype); f32_temps is a
    conservative count of in-kernel full-tile f32 temporaries.
    """
    bytes_per_row = d_eff * (io_bufs * itemsize + f32_temps * 4)
    rows = max(8, vmem_limit // max(1, bytes_per_row))
    if max_rows is not None:
        rows = max(8, min(rows, int(max_rows)))
    if rows >= rows_f:
        return rows_f                      # single block == full row extent (legal)
    return max(8, (rows // 8) * 8)         # multiple of 8 sublanes


# ---------------------------------------------------------------------------
# Pallas kernels
# ---------------------------------------------------------------------------
def _stats_kernel(shift_ref, x_ref, sum_ref, sumsq_ref, *,
                  tile_rows, n_rows, blocks_per_split):
    """Shifted per-feature sum / sum-of-squares, streamed over row tiles."""
    c = pl.program_id(0)                   # TensorCore split
    i = pl.program_id(1)                   # row block within the split

    @pl.when(i == 0)
    def _():
        sum_ref[...] = jnp.zeros_like(sum_ref)
        sumsq_ref[...] = jnp.zeros_like(sumsq_ref)

    # Mask rows of the ragged last block / duplicated clamped block.
    row_start = (c * blocks_per_split + i) * tile_rows
    valid = n_rows - row_start
    row_ids = jax.lax.broadcasted_iota(jnp.int32, x_ref.shape, 0)
    xc = x_ref[...].astype(jnp.float32) - shift_ref[...]
    xc = jnp.where(row_ids < valid, xc, 0.0)

    sum_ref[...] += jnp.sum(xc, axis=0, keepdims=True)
    sumsq_ref[...] += jnp.sum(xc * xc, axis=0, keepdims=True)


def _normalize_kernel(x_ref, mean_ref, var_ref, o_ref, *, clip, epsilon):
    """out = clip((x - mean) * rsqrt(var + eps)); scale/shift from (1,D) tiles."""
    scale = jax.lax.rsqrt(var_ref[...] + epsilon)       # tiny (1, D_eff), EUP
    shift = -mean_ref[...] * scale
    y = x_ref[...].astype(jnp.float32) * scale + shift
    # Python truthiness: clip=0.0 / None disables (matches torch `if self.clip:`).
    if clip:
        y = jnp.clip(y, -clip, clip)
    o_ref[...] = y.astype(o_ref.dtype)


# ---------------------------------------------------------------------------
# JAX wrapper mirroring the PyTorch module
# ---------------------------------------------------------------------------
class RunningMeanStd:
    """Running mean/std observation normalizer (Pallas TPU forward)."""

    # TODO(synk): multi-dimensional feature `shape`s are assumed to be already
    # flattened into the trailing axis of `x` (typical RL usage: shape=(obs_dim,)).

    def __init__(self, shape, clip=5.0, epsilon=1e-08, max_tile_rows=None):
        self.mean = jnp.zeros(shape, jnp.float32)
        self.var = jnp.ones(shape, jnp.float32)
        self.count = jnp.asarray(epsilon, jnp.float32)
        self.clip = clip
        self.epsilon = epsilon
        self._max_tile_rows = max_tile_rows   # tuning/testing knob

    # ---- layout: zero-copy lane folding ------------------------------------
    @staticmethod
    def _as_2d(x):
        return x if x.ndim == 2 else x.reshape(-1, x.shape[-1])

    @staticmethod
    def _layout(x2d):
        n, d = x2d.shape
        fold = _LANE // d if (d < _LANE and _LANE % d == 0) else 1
        if fold > 1 and n % fold != 0:
            fold = 1                        # folding must stay a free reshape
        d_eff = d * fold
        rows_f = n // fold
        return x2d.reshape(rows_f, d_eff), fold, rows_f, d_eff

    def _folded_stat(self, v, fold, d_eff):
        v = v.astype(jnp.float32).reshape(-1)
        if fold > 1:
            v = jnp.tile(v, fold)
        return v.reshape(1, d_eff)

    # ---- pass 1: streamed batch statistics ---------------------------------
    def _batch_stats(self, xf, fold, rows_f, d_eff, n):
        d = d_eff // fold
        itemsize = jnp.dtype(xf.dtype).itemsize
        vmem_limit = _vmem_limit_bytes()
        tile_rows = _pick_tile_rows(d_eff, rows_f, itemsize, vmem_limit,
                                    io_bufs=2, f32_temps=5,
                                    max_rows=self._max_tile_rows)
        num_blocks = _cdiv(rows_f, tile_rows)
        num_splits = 2 if num_blocks >= 2 else 1   # v7x: one partial acc per TC
        blocks_per_split = _cdiv(num_blocks, num_splits)

        shift = self._folded_stat(self.mean, fold, d_eff)

        def x_map(c, i):
            b = c * blocks_per_split + i
            # Clamp out-of-range blocks to a valid block; their rows are
            # masked to zero in-kernel, so the duplicate read is inert.
            return (jnp.minimum(b, num_blocks - 1), 0)

        acc_spec = pl.BlockSpec((None, 1, d_eff), lambda c, i: (c, 0, 0))
        s, sq = pl.pallas_call(
            functools.partial(_stats_kernel, tile_rows=tile_rows, n_rows=rows_f,
                              blocks_per_split=blocks_per_split),
            out_shape=(
                jax.ShapeDtypeStruct((num_splits, 1, d_eff), jnp.float32),
                jax.ShapeDtypeStruct((num_splits, 1, d_eff), jnp.float32),
            ),
            grid=(num_splits, blocks_per_split),
            in_specs=[pl.BlockSpec((1, d_eff), lambda c, i: (0, 0)),
                      pl.BlockSpec((tile_rows, d_eff), x_map)],
            out_specs=(acc_spec, acc_spec),
            compiler_params=pltpu.CompilerParams(
                dimension_semantics=("parallel", "arbitrary"),
                vmem_limit_bytes=vmem_limit),
        )(shift, xf)

        # Tiny un-fold: merge the per-split / per-fold partials per feature.
        s = s.reshape(num_splits * fold, d).sum(axis=0)
        sq = sq.reshape(num_splits * fold, d).sum(axis=0)
        shifted_mean = s / n
        batch_mean = self.mean.astype(jnp.float32).reshape(-1) + shifted_mean
        batch_var = jnp.maximum(sq / n - shifted_mean * shifted_mean, 0.0)
        return batch_mean, batch_var

    def _update_from(self, xf, fold, rows_f, d_eff, n):
        batch_mean, batch_var = self._batch_stats(xf, fold, rows_f, d_eff, n)
        batch_mean = batch_mean.reshape(self.mean.shape)
        batch_var = batch_var.reshape(self.var.shape)
        batch_count = n

        delta = batch_mean - self.mean
        tot_count = self.count + batch_count
        new_mean = self.mean + delta * batch_count / tot_count
        m_a = self.var * self.count
        m_b = batch_var * batch_count
        m2 = m_a + m_b + delta ** 2 * self.count * batch_count / tot_count
        self.mean = new_mean
        self.var = m2 / tot_count
        self.count = tot_count

    def update(self, x):
        x2d = self._as_2d(x)
        xf, fold, rows_f, d_eff = self._layout(x2d)
        self._update_from(xf, fold, rows_f, d_eff, n=x2d.shape[0])

    # ---- pass 2: normalization ----------------------------------------------
    def _normalize(self, xf, fold, rows_f, d_eff, out_dtype):
        itemsize = jnp.dtype(xf.dtype).itemsize
        vmem_limit = _vmem_limit_bytes()
        tile_rows = _pick_tile_rows(d_eff, rows_f, itemsize, vmem_limit,
                                    io_bufs=4, f32_temps=4,
                                    max_rows=self._max_tile_rows)
        num_blocks = _cdiv(rows_f, tile_rows)

        mean_f = self._folded_stat(self.mean, fold, d_eff)
        var_f = self._folded_stat(self.var, fold, d_eff)

        return pl.pallas_call(
            functools.partial(_normalize_kernel, clip=self.clip,
                              epsilon=self.epsilon),
            out_shape=jax.ShapeDtypeStruct((rows_f, d_eff), out_dtype),
            grid=(num_blocks,),
            in_specs=[pl.BlockSpec((tile_rows, d_eff), lambda i: (i, 0)),
                      pl.BlockSpec((1, d_eff), lambda i: (0, 0)),
                      pl.BlockSpec((1, d_eff), lambda i: (0, 0))],
            out_specs=pl.BlockSpec((tile_rows, d_eff), lambda i: (i, 0)),
            compiler_params=pltpu.CompilerParams(
                dimension_semantics=("parallel",),
                vmem_limit_bytes=vmem_limit),
        )(xf, mean_f, var_f)

    def __call__(self, x, update=False):
        orig_shape = x.shape
        x2d = self._as_2d(x)
        # Zero-copy folded layout computed once and shared by both passes.
        xf, fold, rows_f, d_eff = self._layout(x2d)
        if update:
            self._update_from(xf, fold, rows_f, d_eff, n=x2d.shape[0])
        out = self._normalize(xf, fold, rows_f, d_eff, out_dtype=x.dtype)
        return out.reshape(orig_shape)


# ---------------------------------------------------------------------------
# Pure-JAX reference (mirrors the PyTorch forward exactly)
# ---------------------------------------------------------------------------
def _reference_forward(x, mean, var, clip, epsilon):
    result = (x - mean) / jnp.sqrt(var + epsilon)
    if clip:
        result = jnp.clip(result, -clip, clip)
    return result


def _check_case(rms, batches, d, clip, epsilon):
    ref_mean = jnp.zeros((d,), jnp.float32)
    ref_var = jnp.ones((d,), jnp.float32)
    ref_count = jnp.asarray(epsilon, jnp.float32)
    for x in batches:
        out = rms(x, update=True)
        jax.block_until_ready(out)

        # reference running-stat update (matches torch update())
        x2d = x.reshape(-1, d)
        bm = x2d.mean(axis=0)
        bv = x2d.var(axis=0)
        bc = x2d.shape[0]
        delta = bm - ref_mean
        tot = ref_count + bc
        ref_mean = ref_mean + delta * bc / tot
        ref_var = (ref_var * ref_count + bv * bc
                   + delta ** 2 * ref_count * bc / tot) / tot
        ref_count = tot

        ref_out = _reference_forward(x, ref_mean, ref_var, clip, epsilon)
        assert out.shape == x.shape and out.dtype == x.dtype
        assert jnp.allclose(out, ref_out, atol=1e-5, rtol=1e-5), "forward mismatch"
        assert jnp.allclose(rms.mean, ref_mean, atol=1e-5, rtol=1e-5), "mean mismatch"
        assert jnp.allclose(rms.var, ref_var, atol=1e-5, rtol=1e-5), "var mismatch"

    # pure normalization path (update=False)
    out = rms(batches[0], update=False)
    jax.block_until_ready(out)
    ref_out = _reference_forward(batches[0], ref_mean, ref_var, clip, epsilon)
    assert jnp.allclose(out, ref_out, atol=1e-5, rtol=1e-5), "normalize mismatch"


if __name__ == "__main__":
    key = jax.random.PRNGKey(0)
    k1, k2, k3, k4 = jax.random.split(key, 4)

    # Case 1: D=32 (lane-folded 4x to 128), small 3-D batches, single row block.
    D1 = 32
    rms1 = RunningMeanStd(shape=(D1,), clip=5.0, epsilon=1e-08)
    b1 = [jax.random.normal(k1, (2, 8, D1), jnp.float32) * 3.0 + 1.5,
          jax.random.normal(k2, (4, 8, D1), jnp.float32) * 0.5 - 2.0]
    _check_case(rms1, b1, D1, clip=5.0, epsilon=1e-08)

    # Case 2: D=20 (no fold possible), ragged row counts, tiny tile cap to
    # exercise the multi-block / dual-split / masked-boundary kernel paths.
    D2 = 20
    rms2 = RunningMeanStd(shape=(D2,), clip=5.0, epsilon=1e-08, max_tile_rows=8)
    b2 = [jax.random.normal(k3, (5, 10, D2), jnp.float32) * 2.0 + 4.0,
          jax.random.normal(k4, (3, 7, D2), jnp.float32) - 1.0]
    _check_case(rms2, b2, D2, clip=5.0, epsilon=1e-08)

    print("KERNEL_OK")
</pallas_src>

<mosaic_0001>
module attributes {stable_mosaic.version = 11 : i64} {
  func.func @_stats_kernel(%arg0: i32, %arg1: i32, %arg2: memref<1x128xf32, #tpu.memory_space<vmem>>, %arg3: memref<4x128xf32, #tpu.memory_space<vmem>>, %arg4: memref<1x1x128xf32, #tpu.memory_space<vmem>>, %arg5: memref<1x1x128xf32, #tpu.memory_space<vmem>>) attributes {dimension_semantics = [#tpu.dimension_semantics<parallel>, #tpu.dimension_semantics<arbitrary>], iteration_bounds = array<i64: 1, 1>, scalar_prefetch = 0 : i64, scratch_operands = 0 : i64, tpu.core_type = #tpu.core_type<tc>, window_params = [{pipeline_mode = #tpu.pipeline_mode<synchronous>, transform_indices = @transform_0, window_bounds = array<i64: 1, 128>}, {transform_indices = @transform_1, window_bounds = array<i64: 4, 128>}, {transform_indices = @transform_2, window_bounds = array<i64: 1, 1, 128>}, {transform_indices = @transform_3, window_bounds = array<i64: 1, 1, 128>}]} {
    %c0_i32 = arith.constant 0 : i32
    %0 = arith.cmpi eq, %arg1, %c0_i32 : i32
    %1 = arith.extui %0 : i1 to i32
    %c0_i32_0 = arith.constant 0 : i32
    %2 = arith.cmpi ne, %1, %c0_i32_0 : i32
    scf.if %2 {
      %cst_19 = arith.constant 0.000000e+00 : f32
      %33 = vector.broadcast %cst_19 : f32 to vector<1x128xf32>
      %c0_20 = arith.constant 0 : index
      %c0_21 = arith.constant 0 : index
      %c0_22 = arith.constant 0 : index
      %34 = vector.load %arg4[%c0_20, %c0_21, %c0_22] : memref<1x1x128xf32, #tpu.memory_space<vmem>>, vector<1x1x128xf32>
      %35 = vector.shape_cast %34 : vector<1x1x128xf32> to vector<1x128xf32>
      %36 = vector.shape_cast %33 : vector<1x128xf32> to vector<1x1x128xf32>
      tpu.vector_store %arg4[%c0_20, %c0_21, %c0_22], %36 {strides = array<i32>} : memref<1x1x128xf32, #tpu.memory_space<vmem>>, vector<1x1x128xf32>,
      %cst_23 = arith.constant 0.000000e+00 : f32
      %37 = vector.broadcast %cst_23 : f32 to vector<1x128xf32>
      %c0_24 = arith.constant 0 : index
      %c0_25 = arith.constant 0 : index
      %c0_26 = arith.constant 0 : index
      %38 = vector.load %arg5[%c0_24, %c0_25, %c0_26] : memref<1x1x128xf32, #tpu.memory_space<vmem>>, vector<1x1x128xf32>
      %39 = vector.shape_cast %38 : vector<1x1x128xf32> to vector<1x128xf32>
      %40 = vector.shape_cast %37 : vector<1x128xf32> to vector<1x1x128xf32>
      tpu.vector_store %arg5[%c0_24, %c0_25, %c0_26], %40 {strides = array<i32>} : memref<1x1x128xf32, #tpu.memory_space<vmem>>, vector<1x1x128xf32>,
    } else {
    }
    %c1_i32 = arith.constant 1 : i32
    %3 = arith.muli %arg0, %c1_i32 : i32
    %4 = arith.addi %3, %arg1 : i32
    %c4_i32 = arith.constant 4 : i32
    %5 = arith.muli %4, %c4_i32 : i32
    %c4_i32_1 = arith.constant 4 : i32
    %6 = arith.subi %c4_i32_1, %5 : i32
    %7 = tpu.iota {dimensions = array<i32: 0>} : vector<4x128xi32>
    %c0 = arith.constant 0 : index
    %c0_2 = arith.constant 0 : index
    %8 = vector.load %arg3[%c0, %c0_2] : memref<4x128xf32, #tpu.memory_space<vmem>>, vector<4x128xf32>
    %c0_3 = arith.constant 0 : index
    %c0_4 = arith.constant 0 : index
    %9 = vector.load %arg2[%c0_3, %c0_4] : memref<1x128xf32, #tpu.memory_space<vmem>>, vector<1x128xf32>
    %10 = vector.broadcast %9 : vector<1x128xf32> to vector<4x128xf32>
    %11 = arith.subf %8, %10 : vector<4x128xf32>
    %12 = vector.broadcast %6 : i32 to vector<4x128xi32>
    %13 = arith.cmpi slt, %7, %12 : vector<4x128xi32>
    %cst = arith.constant 0.000000e+00 : f32
    %14 = vector.broadcast %cst : f32 to vector<4x128xf32>
    %15 = arith.select %13, %11, %14 : vector<4x128xi1>, vector<4x128xf32>
    %c0_5 = arith.constant 0 : index
    %c0_6 = arith.constant 0 : index
    %c0_7 = arith.constant 0 : index
    %16 = vector.load %arg4[%c0_5, %c0_6, %c0_7] : memref<1x1x128xf32, #tpu.memory_space<vmem>>, vector<1x1x128xf32>
    %17 = vector.shape_cast %16 : vector<1x1x128xf32> to vector<1x128xf32>
    %cst_8 = arith.constant dense<0.000000e+00> : vector<128xf32>
    %18 = vector.multi_reduction <add>, %15, %cst_8 [0] : vector<4x128xf32> to vector<128xf32>
    %19 = vector.shape_cast %18 : vector<128xf32> to vector<1x128xf32>
    %20 = arith.addf %17, %19 : vector<1x128xf32>
    %c0_9 = arith.constant 0 : index
    %c0_10 = arith.constant 0 : index
    %c0_11 = arith.constant 0 : index
    %21 = vector.load %arg4[%c0_9, %c0_10, %c0_11] : memref<1x1x128xf32, #tpu.memory_space<vmem>>, vector<1x1x128xf32>
    %22 = vector.shape_cast %21 : vector<1x1x128xf32> to vector<1x128xf32>
    %23 = vector.shape_cast %20 : vector<1x128xf32> to vector<1x1x128xf32>
    tpu.vector_store %arg4[%c0_9, %c0_10, %c0_11], %23 {strides = array<i32>} : memref<1x1x128xf32, #tpu.memory_space<vmem>>, vector<1x1x128xf32>,
    %c0_12 = arith.constant 0 : index
    %c0_13 = arith.constant 0 : index
    %c0_14 = arith.constant 0 : index
    %24 = vector.load %arg5[%c0_12, %c0_13, %c0_14] : memref<1x1x128xf32, #tpu.memory_space<vmem>>, vector<1x1x128xf32>
    %25 = vector.shape_cast %24 : vector<1x1x128xf32> to vector<1x128xf32>
    %26 = arith.mulf %15, %15 : vector<4x128xf32>
    %cst_15 = arith.constant dense<0.000000e+00> : vector<128xf32>
    %27 = vector.multi_reduction <add>, %26, %cst_15 [0] : vector<4x128xf32> to vector<128xf32>
    %28 = vector.shape_cast %27 : vector<128xf32> to vector<1x128xf32>
    %29 = arith.addf %25, %28 : vector<1x128xf32>
    %c0_16 = arith.constant 0 : index
    %c0_17 = arith.constant 0 : index
    %c0_18 = arith.constant 0 : index
    %30 = vector.load %arg5[%c0_16, %c0_17, %c0_18] : memref<1x1x128xf32, #tpu.memory_space<vmem>>, vector<1x1x128xf32>
    %31 = vector.shape_cast %30 : vector<1x1x128xf32> to vector<1x128xf32>
    %32 = vector.shape_cast %29 : vector<1x128xf32> to vector<1x1x128xf32>
    tpu.vector_store %arg5[%c0_16, %c0_17, %c0_18], %32 {strides = array<i32>} : memref<1x1x128xf32, #tpu.memory_space<vmem>>, vector<1x1x128xf32>,
    return
  }
  func.func @transform_0(%arg0: i32, %arg1: i32) -> (i32, i32) {
    %c0_i32 = arith.constant 0 : i32
    %c0_i32_0 = arith.constant 0 : i32
    %c0_i32_1 = arith.constant 0 : i32
    return %c0_i32, %c0_i32_0 : i32, i32
  }
  func.func @transform_1(%arg0: i32, %arg1: i32) -> (i32, i32) {
    %c1_i32 = arith.constant 1 : i32
    %0 = arith.muli %arg0, %c1_i32 : i32
    %1 = arith.addi %0, %arg1 : i32
    %c0_i32 = arith.constant 0 : i32
    %2 = arith.minsi %1, %c0_i32 : i32
    %c0_i32_0 = arith.constant 0 : i32
    %c0_i32_1 = arith.constant 0 : i32
    return %2, %c0_i32_0 : i32, i32
  }
  func.func @transform_2(%arg0: i32, %arg1: i32) -> (i32, i32, i32) {
    %c0_i32 = arith.constant 0 : i32
    %c0_i32_0 = arith.constant 0 : i32
    %c0_i32_1 = arith.constant 0 : i32
    return %arg0, %c0_i32, %c0_i32_0 : i32, i32, i32
  }
  func.func @transform_3(%arg0: i32, %arg1: i32) -> (i32, i32, i32) {
    %c0_i32 = arith.constant 0 : i32
    %c0_i32_0 = arith.constant 0 : i32
    %c0_i32_1 = arith.constant 0 : i32
    return %arg0, %c0_i32, %c0_i32_0 : i32, i32, i32
  }
}

</mosaic_0001>

<llo_original>
// kernel: tpu_custom_call.1
$region0: #{tpu_custom_call.1}
  #allocation0 [shape = 'u32[]', space=smem, size = 0x4, offset = 0x4, fixed_abs, tag = 'smem constant byte address 0x4 - core index']
  #allocation1 [shape = 'u32[144,128]{1,0:T(1,128)}', space=vmem, size = 0x12000, scoped, tag = 'internal scratch']
  %s0 = inlined_call_operand.hbm [shape: f32[1,128], index: 0, kind: input, shape index: {}]
  %s1 = inlined_call_operand.hbm [shape: f32[4,128], index: 1, kind: input, shape index: {}]
  %s2 = inlined_call_operand.hbm [shape: f32[1,1,128], index: 2, kind: output, shape index: {0}]
  %s3 = inlined_call_operand.hbm [shape: f32[1,1,128], index: 3, kind: output, shape index: {1}]
  %4 = xla_tuple %s2, %s3
  %s5 = sld [smem:[#allocation0]]
  $region38: #{tpu_custom_call.1} parent=0
    _
  %s7 = ssub.s32 1, %s5
  %s8 = scalar_select 0, %s7, %s5
  $region1: #{tpu_custom_call.1} parent=0
    #allocation2 [shape = 'u8[512]{0}', space=vmem, size = 0x400, scoped, tag = 'input window, operand 0, single buffered']
    #allocation3 [shape = 's32[1]{0}', space=sflag, size = 0x4, scoped, tag = 'scoped memory for tpu_custom_call.1']
    #allocation4 [shape = 's32[1]{0}', space=sflag, size = 0x4, scoped, tag = 'scoped memory for tpu_custom_call.1']
    #allocation5 [shape = 'u8[2048]{0}', space=vmem, size = 0x800, scoped, tag = 'input window, operand 1, single buffered']
    #allocation6 [shape = 's32[1]{0}', space=sflag, size = 0x4, scoped, tag = 'scoped memory for tpu_custom_call.1']
    #allocation7 [shape = 'u8[512]{0}', space=vmem, size = 0x400, scoped, tag = 'output window, operand 0, single buffered']
    #allocation8 [shape = 'u8[512]{0}', space=vmem, size = 0x400, scoped, tag = 'output window, operand 1, single buffered']
    #allocation9 [shape = 's32[1]{0}', space=sflag, size = 0x4, scoped, tag = 'scoped memory for tpu_custom_call.1']
    %9 = vsyncpa [#allocation3], 0
    %10 = vsyncpa [#allocation6], 0
    %11 = vsyncpa [#allocation4], 0
    %12 = vsyncpa [#allocation9], 0
    // Predicated region
    $region2: #{tpu_custom_call.1} parent=1 // pred_check
      _
    $region3: #{tpu_custom_call.1} parent=1 // pred_check_branch
      %14 = sbr.rel (0) target = $region5
    $region4: #{tpu_custom_call.1} parent=1 // pred_region
      %s16 = ssub.s32 16, 16
      %17 = vsyncadd [#allocation3], %s16
      %s19 = sshll.u32 [#allocation2], 4
      %s20 = int_to_ptr.vmem [resolvable:$true] %s19
      %22 = dma.hbm_to_vmem [thread:$0]  %s0, 16, %s20, [#allocation3]
    $region5: #{tpu_custom_call.1} parent=1 // pred_fallthru
      _
    // Predicated region
    $region6: #{tpu_custom_call.1} parent=1 // pred_check
      _
    $region7: #{tpu_custom_call.1} parent=1 // pred_check_branch
      %24 = sbr.rel (0) target = $region9
    $region8: #{tpu_custom_call.1} parent=1 // pred_region
      %s25 = sadd.s32 0, 0
      %p26 = scmp.lt.s32.totalorder %s25, 0
      %s27 = scalar_select %p26, %s25, 0
      %s29 = ssub.s32 64, 64
      %30 = vsyncadd [#allocation6], %s29
      %s31 = smul.addr %s27, 64
      %s32 = scalar_lea.hbm %s1, %s31
      %s34 = sshll.u32 [#allocation5], 4
      %s35 = int_to_ptr.vmem [resolvable:$true] %s34
      %37 = dma.hbm_to_vmem [thread:$0]  %s32, 64, %s35, [#allocation6]
    $region9: #{tpu_custom_call.1} parent=1 // pred_fallthru
      _
    // Predicated region
    $region10: #{tpu_custom_call.1} parent=1 // pred_check
      _
    $region11: #{tpu_custom_call.1} parent=1 // pred_check_branch
      %39 = sbr.rel (0) target = $region13
    $region12: #{tpu_custom_call.1} parent=1 // pred_region
      %40 = dma.done [#allocation3], 16
    $region13: #{tpu_custom_call.1} parent=1 // pred_fallthru
      _
    // Predicated region
    $region14: #{tpu_custom_call.1} parent=1 // pred_check
      _
    $region15: #{tpu_custom_call.1} parent=1 // pred_check_branch
      %42 = sbr.rel (0) target = $region17
    $region16: #{tpu_custom_call.1} parent=1 // pred_region
      %43 = dma.done [#allocation6], 64
    $region17: #{tpu_custom_call.1} parent=1 // pred_fallthru
      _
    %s44 = sadd.s32 0, 0
    %p45 = scmp.lt.s32.totalorder %s44, 0
    %s46 = scalar_select %p45, %s44, 0
    %p47 = scmp.eq.s32.totalorder 0, 0
    // Predicated region
    $region18: #{tpu_custom_call.1} parent=1 // pred_check
      %p48 = pneg %p47
    $region19: #{tpu_custom_call.1} parent=1 // pred_check_branch
      %50 = sbr.rel (%p48) target = $region21
    $region20: #{tpu_custom_call.1} parent=1 // pred_region
      %51 = vst [vmem:[#allocation7] sm:$0x1] 0.0
      %52 = vst [vmem:[#allocation8] sm:$0x1] 0.0
    $region21: #{tpu_custom_call.1} parent=1 // pred_fallthru
      _
    %s53 = sadd.s32 0, 0
    %s54 = smul.u32 %s53, 4
    %s55 = ssub.s32 4, %s54
    %v56 = vlaneseq
    %v57 = vshrl.u32 %v56, 7
    %v58 = vld [vmem:[#allocation5] sm:$0xf]
    %v59 = vld [vmem:[#allocation2] sm:$0x1]
    %v61 = vlaneseq
    %v62 = vshrl.u32 %v61, 7
    %v63 = vsub.s32 0, %v62
    %v64 = vrot.slane %v59, %v63
    %v66 = vsub.f32 %v58, %v64
    %v67 = vstv %s55
    %vm68 = vcmp.lt.s32.totalorder %v57, %v67
    %v69 = vsel %vm68, %v66, 0.0
    %v70 = vld [vmem:[#allocation7] sm:$0x1]
    %vm71 = vcmask 1043456
    %v72 = vsel %vm71, %v69, 0.0
    %v73 = vrot.slane %v72, 4
    %v74 = vadd.f32 %v72, %v73
    %v75 = vrot.slane %v74, 2
    %v76 = vadd.f32 %v74, %v75
    %v77 = vrot.slane %v76, 1
    %v78 = vadd.f32 %v76, %v77
    %v79 = vadd.f32 %v70, %v78
    %80 = vst [vmem:[#allocation7] sm:$0x1] %v79
    %v81 = vld [vmem:[#allocation8] sm:$0x1]
    %v82 = vmul.f32 %v69, %v69
    %v83 = vsel %vm71, %v82, 0.0
    %v84 = vrot.slane %v83, 4
    %v85 = vadd.f32 %v83, %v84
    %v86 = vrot.slane %v85, 2
    %v87 = vadd.f32 %v85, %v86
    %v88 = vrot.slane %v87, 1
    %v89 = vadd.f32 %v87, %v88
    %v90 = vadd.f32 %v81, %v89
    %91 = vst [vmem:[#allocation8] sm:$0x1] %v90
    // Predicated region
    $region22: #{tpu_custom_call.1} parent=1 // pred_check
      _
    $region23: #{tpu_custom_call.1} parent=1 // pred_check_branch
      %93 = sbr.rel (0) target = $region25
    $region24: #{tpu_custom_call.1} parent=1 // pred_region
      %s95 = ssub.s32 16, 16
      %96 = vsyncadd [#allocation4], %s95
      %s98 = sshll.u32 [#allocation7], 4
      %s99 = int_to_ptr.vmem [resolvable:$true] %s98
      %101 = dma.vmem_to_hbm [thread:$0]  %s99, 16, %s2, [#allocation4]
    $region25: #{tpu_custom_call.1} parent=1 // pred_fallthru
      _
    // Predicated region
    $region26: #{tpu_custom_call.1} parent=1 // pred_check
      _
    $region27: #{tpu_custom_call.1} parent=1 // pred_check_branch
      %103 = sbr.rel (0) target = $region29
    $region28: #{tpu_custom_call.1} parent=1 // pred_region
      %s105 = ssub.s32 16, 16
      %106 = vsyncadd [#allocation9], %s105
      %s108 = sshll.u32 [#allocation8], 4
      %s109 = int_to_ptr.vmem [resolvable:$true] %s108
      %111 = dma.vmem_to_hbm [thread:$0]  %s109, 16, %s3, [#allocation9]
    $region29: #{tpu_custom_call.1} parent=1 // pred_fallthru
      _
    // Predicated region
    $region30: #{tpu_custom_call.1} parent=1 // pred_check
      _
    $region31: #{tpu_custom_call.1} parent=1 // pred_check_branch
      %113 = sbr.rel (0) target = $region33
    $region32: #{tpu_custom_call.1} parent=1 // pred_region
      %114 = dma.done [#allocation4], 16
    $region33: #{tpu_custom_call.1} parent=1 // pred_fallthru
      _
    // Predicated region
    $region34: #{tpu_custom_call.1} parent=1 // pred_check
      _
    $region35: #{tpu_custom_call.1} parent=1 // pred_check_branch
      %116 = sbr.rel (0) target = $region37
    $region36: #{tpu_custom_call.1} parent=1 // pred_region
      %117 = dma.done [#allocation9], 16
    $region37: #{tpu_custom_call.1} parent=1 // pred_fallthru
      _
    %118 = vsyncpa [#allocation3], 1
    %119 = vsyncpa [#allocation6], 1
    %120 = vsyncpa [#allocation4], 1
    %121 = vsyncpa [#allocation9], 1

</llo_original>
